<compile_context>
chip_gen: v7x
topology: tpu7x:2x2x1
jax: 0.10.0
libtpu: 0.0.40
codegen_flags: <defaults>
</compile_context>

<pallas_src>
import jax
import jax.numpy as jnp
from jax.experimental import pallas as pl
from jax.experimental.pallas import tpu as pltpu

BATCH_NORM_EPSILON = 1e-5


# ----------------------------------------------------------------------------
# Generation-aware VMEM budgeting
# ----------------------------------------------------------------------------
def _vmem_capacity_bytes():
    try:
        return int(pltpu.get_tpu_info().vmem_capacity_bytes)
    except Exception:
        return 64 * 1024 * 1024  # conservative fallback (v7x per-core VMEM)


def _vmem_limit_bytes(cap=None):
    cap = _vmem_capacity_bytes() if cap is None else cap
    # Raise the scoped limit well above the 16/32 MiB defaults, but stay
    # comfortably below physical capacity.
    return min(int(cap * 0.85), 112 * 1024 * 1024)


def _fused_vmem_estimate(n, c_in, params):
    """Rough VMEM estimate for the fully fused path (includes the 2x pipeline
    double-buffering on auto-DMA'd blocks and the live f32 temporaries)."""
    num_layers = len(params)
    b = 2 * n * c_in * 2                       # x (bf16), double-buffered
    b += 2 * params[0]["w"].size * 2           # W0 (bf16), double-buffered
    for p in params[1:]:
        b += p["w"].size * 2                   # manual single-buffered VMEM scratch
    for i, p in enumerate(params):
        d = p["w"].shape[1]
        b += 2 * d * 4 * (1 if i == num_layers - 1 else 2)   # gamma (+beta)
    out_dim = params[-1]["w"].shape[1]
    b += 2 * n * out_dim * 4                   # output block, double-buffered
    # live f32 temporaries (y/d + out) of the widest layer + bf16 activation
    max_d = max(p["w"].shape[1] for p in params)
    b += 3 * n * max_d * 4 + n * max_d * 2
    return b


# ----------------------------------------------------------------------------
# Path 1: fully fused Linear -> BN -> (ReLU) stack in one pallas_call
# ----------------------------------------------------------------------------
def _make_fused_kernel(num_layers, eps):
    nm = num_layers - 1                         # manually DMA'd weights W1..W_{L-1}
    n_gb = 2 * (num_layers - 1) + 1             # gammas + betas (last layer: gamma only)

    def kernel(*refs):
        pos = 0
        x_ref = refs[pos]; pos += 1             # (N, C_in) bf16, VMEM
        w0_ref = refs[pos]; pos += 1            # (C_in, D0) bf16, VMEM
        w_hbm = refs[pos:pos + nm]; pos += nm   # raw HBM refs (pl.ANY)
        gb = refs[pos:pos + n_gb]; pos += n_gb  # (1, D) f32, VMEM
        o_ref = refs[pos]; pos += 1
        w_bufs = refs[pos:pos + nm]; pos += nm  # VMEM scratch for W1..
        sems = refs[pos] if nm > 0 else None    # DMA semaphores

        # Kick off all later-layer weight DMAs so they overlap layer-0 compute.
        copies = []
        for j in range(nm):
            cp = pltpu.make_async_copy(w_hbm[j], w_bufs[j], sems.at[j])
            cp.start()
            copies.append(cp)

        # Unpack gamma/beta refs per layer.
        gammas, betas = [], []
        g_idx = 0
        for i in range(num_layers):
            gammas.append(gb[g_idx]); g_idx += 1
            if i != num_layers - 1:
                betas.append(gb[g_idx]); g_idx += 1
            else:
                betas.append(None)

        def bn_block(h, w, gamma, beta, relu):
            # Linear (bias=False): bf16 operands, f32 accumulation on the MXU.
            y = jnp.dot(h, w, preferred_element_type=jnp.float32)
            inv_n = 1.0 / y.shape[0]
            # Two-pass (centered) batch statistics -> no E[y^2]-mean^2 cancellation.
            mean = jnp.sum(y, axis=0, keepdims=True) * inv_n
            d = y - mean
            var = jnp.sum(d * d, axis=0, keepdims=True) * inv_n
            scale = jax.lax.rsqrt(var + eps) * gamma        # EUP rsqrt, folded gamma
            out = d * scale
            if beta is not None:
                out = out + beta
            if relu:
                out = jnp.maximum(out, 0.0)
            return out

        h = x_ref[...]                                      # already bf16
        for i in range(num_layers):
            last = i == num_layers - 1
            if i == 0:
                w = w0_ref[...]
            else:
                copies[i - 1].wait()                        # weight is ready by now
                w = w_bufs[i - 1][...]
            beta = betas[i][...] if betas[i] is not None else None
            h = bn_block(h, w, gammas[i][...], beta, relu=not last)
            if not last:
                h = h.astype(jnp.bfloat16)                  # halve live activation

        o_ref[...] = h.astype(o_ref.dtype)

    return kernel


def contrastive_head_forward_fused(x, params, *, eps=BATCH_NORM_EPSILON):
    n, c_in = x.shape
    num_layers = len(params)
    out_dim = params[-1]["w"].shape[1]
    nm = num_layers - 1

    vmem_cap = _vmem_capacity_bytes()
    vmem_limit = _vmem_limit_bytes(vmem_cap)
    est = _fused_vmem_estimate(n, c_in, params)
    assert est <= vmem_limit, (
        f"fused-path VMEM estimate {est} B exceeds limit {vmem_limit} B; "
        "use contrastive_head_forward_tiled instead")

    inputs = [x.astype(jnp.bfloat16)]
    in_specs = [pl.BlockSpec((n, c_in), lambda i: (0, 0))]

    # W0: auto-DMA'd block (needed immediately).
    k0, d0 = params[0]["w"].shape
    inputs.append(params[0]["w"].astype(jnp.bfloat16))
    in_specs.append(pl.BlockSpec((k0, d0), lambda i: (0, 0)))

    # W1..W_{L-1}: raw HBM refs, manually DMA'd inside the kernel (overlap).
    scratch = []
    for p in params[1:]:
        inputs.append(p["w"].astype(jnp.bfloat16))
        in_specs.append(pl.BlockSpec(memory_space=pl.ANY))
        scratch.append(pltpu.VMEM(p["w"].shape, jnp.bfloat16))

    # gamma/beta: tiny (1, D) blocks, resident in VMEM via auto-DMA.
    for i, p in enumerate(params):
        d = p["w"].shape[1]
        inputs.append(p["gamma"].reshape(1, d).astype(jnp.float32))
        in_specs.append(pl.BlockSpec((1, d), lambda i_: (0, 0)))
        if p.get("beta") is not None:
            inputs.append(p["beta"].reshape(1, d).astype(jnp.float32))
            in_specs.append(pl.BlockSpec((1, d), lambda i_: (0, 0)))

    if nm > 0:
        scratch.append(pltpu.SemaphoreType.DMA((nm,)))

    flops = sum(2 * n * p["w"].shape[0] * p["w"].shape[1] for p in params)
    trans = sum(p["w"].shape[1] for p in params)            # one rsqrt per channel
    bytes_acc = (x.size * 2 + sum(p["w"].size * 2 for p in params)
                 + sum(p["w"].shape[1] * 4 for p in params) * 2
                 + n * out_dim * 4)

    return pl.pallas_call(
        _make_fused_kernel(num_layers, eps),
        out_shape=jax.ShapeDtypeStruct((n, out_dim), jnp.float32),
        grid_spec=pltpu.PrefetchScalarGridSpec(
            num_scalar_prefetch=0,
            grid=(1,),
            in_specs=in_specs,
            out_specs=pl.BlockSpec((n, out_dim), lambda i: (0, 0)),
            scratch_shapes=scratch),
        compiler_params=pltpu.CompilerParams(
            dimension_semantics=("arbitrary",),
            vmem_limit_bytes=vmem_limit),
        cost_estimate=pl.CostEstimate(
            flops=flops, transcendentals=trans, bytes_accessed=bytes_acc),
    )(*inputs)


# ----------------------------------------------------------------------------
# Path 2: batch-tiled two-pass BN (for shapes that do not fit VMEM)
# ----------------------------------------------------------------------------
def _mm_stats_kernel(x_ref, w_ref, y_ref, ssum_ref, ssq_ref):
    """Pass 1: y_tile = x_tile @ W; accumulate per-channel sum / sum-of-squares."""
    i = pl.program_id(0)
    y = jnp.dot(x_ref[...], w_ref[...], preferred_element_type=jnp.float32)
    y_ref[...] = y.astype(y_ref.dtype)

    @pl.when(i == 0)
    def _():
        ssum_ref[...] = jnp.zeros_like(ssum_ref)
        ssq_ref[...] = jnp.zeros_like(ssq_ref)

    ssum_ref[...] += jnp.sum(y, axis=0, keepdims=True)
    ssq_ref[...] += jnp.sum(y * y, axis=0, keepdims=True)


def _make_norm_kernel(relu):
    def kernel(y_ref, scale_ref, shift_ref, o_ref):
        # Folded BN: out = y * scale + shift (2 VALU ops / element).
        out = y_ref[...].astype(jnp.float32) * scale_ref[...] + shift_ref[...]
        if relu:
            out = jnp.maximum(out, 0.0)
        o_ref[...] = out.astype(o_ref.dtype)
    return kernel


def _pick_block_rows(n, requested):
    """Largest multiple of 8 <= requested that divides n (falls back to n)."""
    b = max(8, min(requested, n))
    b = (b // 8) * 8
    while b > 8 and n % b != 0:
        b -= 8
    if b <= 0 or n % b != 0:
        b = n
    return b


def contrastive_head_forward_tiled(x, params, *, eps=BATCH_NORM_EPSILON,
                                   block_rows=256):
    n = x.shape[0]
    tb = _pick_block_rows(n, block_rows)
    nbt = n // tb
    num_layers = len(params)
    vmem_limit = _vmem_limit_bytes()

    h = x.astype(jnp.bfloat16)
    for i, p in enumerate(params):
        last = i == num_layers - 1
        k_dim, d = p["w"].shape
        w = p["w"].astype(jnp.bfloat16)

        # Pass 1: tiled matmul + per-channel stats (weight stays VMEM-resident).
        y, ssum, ssq = pl.pallas_call(
            _mm_stats_kernel,
            out_shape=(jax.ShapeDtypeStruct((n, d), jnp.bfloat16),
                       jax.ShapeDtypeStruct((1, d), jnp.float32),
                       jax.ShapeDtypeStruct((1, d), jnp.float32)),
            grid=(nbt,),
            in_specs=[pl.BlockSpec((tb, k_dim), lambda bi: (bi, 0)),
                      pl.BlockSpec((k_dim, d), lambda bi: (0, 0))],
            out_specs=(pl.BlockSpec((tb, d), lambda bi: (bi, 0)),
                       pl.BlockSpec((1, d), lambda bi: (0, 0)),
                       pl.BlockSpec((1, d), lambda bi: (0, 0))),
            compiler_params=pltpu.CompilerParams(
                dimension_semantics=("arbitrary",),
                vmem_limit_bytes=vmem_limit),
            cost_estimate=pl.CostEstimate(
                flops=2 * n * k_dim * d, transcendentals=0,
                bytes_accessed=n * k_dim * 2 + k_dim * d * 2 + n * d * 2 + 2 * d * 4),
        )(h, w)

        # Fold BN into per-channel scale/shift (O(D) work, plain JAX).
        mean = ssum / n
        var = jnp.maximum(ssq / n - mean * mean, 0.0)
        scale = p["gamma"].reshape(1, d).astype(jnp.float32) * jax.lax.rsqrt(var + eps)
        shift = -mean * scale
        if p.get("beta") is not None:
            shift = shift + p["beta"].reshape(1, d).astype(jnp.float32)

        # Pass 2: per-tile normalize (+ReLU); tiles independent -> "parallel".
        out_dtype = jnp.float32 if last else jnp.bfloat16
        h = pl.pallas_call(
            _make_norm_kernel(relu=not last),
            out_shape=jax.ShapeDtypeStruct((n, d), out_dtype),
            grid=(nbt,),
            in_specs=[pl.BlockSpec((tb, d), lambda bi: (bi, 0)),
                      pl.BlockSpec((1, d), lambda bi: (0, 0)),
                      pl.BlockSpec((1, d), lambda bi: (0, 0))],
            out_specs=pl.BlockSpec((tb, d), lambda bi: (bi, 0)),
            compiler_params=pltpu.CompilerParams(
                dimension_semantics=("parallel",),
                vmem_limit_bytes=vmem_limit),
        )(y, scale, shift)

    return h


# ----------------------------------------------------------------------------
# Dispatcher
# ----------------------------------------------------------------------------
def contrastive_head_forward(x, params, *, eps=BATCH_NORM_EPSILON, block_rows=256):
    n, c_in = x.shape
    if _fused_vmem_estimate(n, c_in, params) <= _vmem_limit_bytes():
        return contrastive_head_forward_fused(x, params, eps=eps)
    return contrastive_head_forward_tiled(x, params, eps=eps, block_rows=block_rows)


# ----------------------------------------------------------------------------
# Matched-precision pure-JAX reference (bf16 matmuls, f32 BN) for validation
# ----------------------------------------------------------------------------
def contrastive_head_ref(x, params, *, eps=BATCH_NORM_EPSILON):
    num_layers = len(params)
    h = x.astype(jnp.bfloat16)
    for i, p in enumerate(params):
        last = i == num_layers - 1
        y = jnp.dot(h, p["w"].astype(jnp.bfloat16),
                    preferred_element_type=jnp.float32)
        inv_n = 1.0 / y.shape[0]
        mean = jnp.sum(y, axis=0, keepdims=True) * inv_n
        d = y - mean
        var = jnp.sum(d * d, axis=0, keepdims=True) * inv_n
        out = d * (jax.lax.rsqrt(var + eps) * p["gamma"][None, :])
        if p.get("beta") is not None:
            out = out + p["beta"][None, :]
        if not last:
            out = jnp.maximum(out, 0.0).astype(jnp.bfloat16)
        h = out
    return h.astype(jnp.float32)


# ----------------------------------------------------------------------------
# Parameter init matching the PyTorch module
# ----------------------------------------------------------------------------
def init_contrastive_head_params(key, channels_in, out_dim=128, num_layers=3):
    params = []
    keys = jax.random.split(key, num_layers)
    for i in range(num_layers):
        last = i == num_layers - 1
        dim = out_dim if last else channels_in
        # nn.Linear(channels_in, dim, bias=False); init.normal_(weight, std=0.01)
        w_oi = jax.random.normal(keys[i], (dim, channels_in), jnp.float32) * 0.01
        params.append({
            "w": jnp.transpose(w_oi),                                 # (channels_in, dim)
            "gamma": jnp.ones((dim,), jnp.float32),                   # bn.weight = 1
            "beta": None if last else jnp.zeros((dim,), jnp.float32), # last: bias=None
        })
    return params


if __name__ == "__main__":
    key = jax.random.PRNGKey(0)
    k_x, k_p = jax.random.split(key)

    # Small shapes consistent with the module; batch is a full 128-row MXU pass.
    BATCH, CIN, OUT_DIM, NUM_LAYERS = 128, 64, 128, 3

    x = jax.random.normal(k_x, (BATCH, CIN), jnp.float32)
    params = init_contrastive_head_params(k_p, CIN, OUT_DIM, NUM_LAYERS)

    ref = jax.block_until_ready(contrastive_head_ref(x, params))

    # Dispatcher picks the fully fused path at this size.
    out_fused = jax.block_until_ready(contrastive_head_forward(x, params))
    assert out_fused.shape == (BATCH, OUT_DIM), out_fused.shape
    assert bool(jnp.all(jnp.isfinite(out_fused)))
    assert bool(jnp.allclose(out_fused, ref, atol=2e-2, rtol=2e-2)), (
        float(jnp.max(jnp.abs(out_fused - ref))))

    # Exercise the batch-tiled two-pass-BN path as well (2 batch tiles).
    # Looser tolerance: the tiled path stores the pre-BN activation in bf16.
    out_tiled = jax.block_until_ready(
        contrastive_head_forward_tiled(x, params, block_rows=64))
    assert out_tiled.shape == (BATCH, OUT_DIM), out_tiled.shape
    assert bool(jnp.all(jnp.isfinite(out_tiled)))
    assert bool(jnp.allclose(out_tiled, ref, atol=5e-2, rtol=5e-2)), (
        float(jnp.max(jnp.abs(out_tiled - ref))))

    print("KERNEL_OK")
</pallas_src>

<mosaic_0001>
module attributes {stable_mosaic.version = 11 : i64} {
  func.func @kernel(%arg0: i32, %arg1: memref<128x64xbf16, #tpu.memory_space<vmem>>, %arg2: memref<64x64xbf16, #tpu.memory_space<vmem>>, %arg3: memref<64x64xbf16, #tpu.memory_space<any>>, %arg4: memref<64x128xbf16, #tpu.memory_space<any>>, %arg5: memref<1x64xf32, #tpu.memory_space<vmem>>, %arg6: memref<1x64xf32, #tpu.memory_space<vmem>>, %arg7: memref<1x64xf32, #tpu.memory_space<vmem>>, %arg8: memref<1x64xf32, #tpu.memory_space<vmem>>, %arg9: memref<1x128xf32, #tpu.memory_space<vmem>>, %arg10: memref<128x128xf32, #tpu.memory_space<vmem>>, %arg11: memref<64x64xbf16, #tpu.memory_space<vmem>>, %arg12: memref<64x128xbf16, #tpu.memory_space<vmem>>, %arg13: memref<2x!tpu.dma_semaphore, #tpu.memory_space<semaphore_mem>>) attributes {dimension_semantics = [#tpu.dimension_semantics<arbitrary>], iteration_bounds = array<i64: 1>, scalar_prefetch = 0 : i64, scratch_operands = 3 : i64, tpu.core_type = #tpu.core_type<tc>, window_params = [{pipeline_mode = #tpu.pipeline_mode<synchronous>, transform_indices = @transform_0, window_bounds = array<i64: 128, 64>}, {pipeline_mode = #tpu.pipeline_mode<synchronous>, transform_indices = @transform_1, window_bounds = array<i64: 64, 64>}, {}, {}, {pipeline_mode = #tpu.pipeline_mode<synchronous>, transform_indices = @transform_4, window_bounds = array<i64: 1, 64>}, {pipeline_mode = #tpu.pipeline_mode<synchronous>, transform_indices = @transform_5, window_bounds = array<i64: 1, 64>}, {pipeline_mode = #tpu.pipeline_mode<synchronous>, transform_indices = @transform_6, window_bounds = array<i64: 1, 64>}, {pipeline_mode = #tpu.pipeline_mode<synchronous>, transform_indices = @transform_7, window_bounds = array<i64: 1, 64>}, {pipeline_mode = #tpu.pipeline_mode<synchronous>, transform_indices = @transform_8, window_bounds = array<i64: 1, 128>}, {pipeline_mode = #tpu.pipeline_mode<synchronous>, transform_indices = @transform_9, window_bounds = array<i64: 128, 128>}]} {
    %c0_i32 = arith.constant 0 : i32
    %0 = tpu.memref_slice %arg13[%c0_i32] : memref<2x!tpu.dma_semaphore, #tpu.memory_space<semaphore_mem>> -> memref<1x!tpu.dma_semaphore, #tpu.memory_space<semaphore_mem>>
    %1 = tpu.memref_squeeze %0 : memref<1x!tpu.dma_semaphore, #tpu.memory_space<semaphore_mem>> -> memref<!tpu.dma_semaphore, #tpu.memory_space<semaphore_mem>>
    tpu.enqueue_dma source(%arg3 : memref<64x64xbf16, #tpu.memory_space<any>>) target(%arg11 : memref<64x64xbf16, #tpu.memory_space<vmem>>) target_semaphore(%1 : memref<!tpu.dma_semaphore, #tpu.memory_space<semaphore_mem>>)
    %c1_i32 = arith.constant 1 : i32
    %2 = tpu.memref_slice %arg13[%c1_i32] : memref<2x!tpu.dma_semaphore, #tpu.memory_space<semaphore_mem>> -> memref<1x!tpu.dma_semaphore, #tpu.memory_space<semaphore_mem>>
    %3 = tpu.memref_squeeze %2 : memref<1x!tpu.dma_semaphore, #tpu.memory_space<semaphore_mem>> -> memref<!tpu.dma_semaphore, #tpu.memory_space<semaphore_mem>>
    tpu.enqueue_dma source(%arg4 : memref<64x128xbf16, #tpu.memory_space<any>>) target(%arg12 : memref<64x128xbf16, #tpu.memory_space<vmem>>) target_semaphore(%3 : memref<!tpu.dma_semaphore, #tpu.memory_space<semaphore_mem>>)
    %c0 = arith.constant 0 : index
    %c0_0 = arith.constant 0 : index
    %4 = vector.load %arg1[%c0, %c0_0] : memref<128x64xbf16, #tpu.memory_space<vmem>>, vector<128x64xbf16>
    %c0_1 = arith.constant 0 : index
    %c0_2 = arith.constant 0 : index
    %5 = vector.load %arg2[%c0_1, %c0_2] : memref<64x64xbf16, #tpu.memory_space<vmem>>, vector<64x64xbf16>
    %c0_3 = arith.constant 0 : index
    %c0_4 = arith.constant 0 : index
    %6 = vector.load %arg6[%c0_3, %c0_4] : memref<1x64xf32, #tpu.memory_space<vmem>>, vector<1x64xf32>
    %c0_5 = arith.constant 0 : index
    %c0_6 = arith.constant 0 : index
    %7 = vector.load %arg5[%c0_5, %c0_6] : memref<1x64xf32, #tpu.memory_space<vmem>>, vector<1x64xf32>
    %cst = arith.constant dense<0.000000e+00> : vector<128x64xf32>
    %8 = tpu.matmul %4, %5, %cst {dimension_numbers = #tpu.dot_dimension_numbers<[1], [0], [0], [1], [0, 0, 1, 1], [], []>} : vector<128x64xbf16>, vector<64x64xbf16>, vector<128x64xf32> -> vector<128x64xf32>
    %cst_7 = arith.constant dense<0.000000e+00> : vector<64xf32>
    %9 = vector.multi_reduction <add>, %8, %cst_7 [0] : vector<128x64xf32> to vector<64xf32>
    %10 = vector.shape_cast %9 : vector<64xf32> to vector<1x64xf32>
    %cst_8 = arith.constant 7.812500e-03 : f32
    %11 = vector.broadcast %cst_8 : f32 to vector<1x64xf32>
    %12 = arith.mulf %10, %11 : vector<1x64xf32>
    %13 = vector.broadcast %12 : vector<1x64xf32> to vector<128x64xf32>
    %14 = arith.subf %8, %13 : vector<128x64xf32>
    %15 = arith.mulf %14, %14 : vector<128x64xf32>
    %cst_9 = arith.constant dense<0.000000e+00> : vector<64xf32>
    %16 = vector.multi_reduction <add>, %15, %cst_9 [0] : vector<128x64xf32> to vector<64xf32>
    %17 = vector.shape_cast %16 : vector<64xf32> to vector<1x64xf32>
    %cst_10 = arith.constant 7.812500e-03 : f32
    %18 = vector.broadcast %cst_10 : f32 to vector<1x64xf32>
    %19 = arith.mulf %17, %18 : vector<1x64xf32>
    %cst_11 = arith.constant 9.99999974E-6 : f32
    %20 = vector.broadcast %cst_11 : f32 to vector<1x64xf32>
    %21 = arith.addf %19, %20 : vector<1x64xf32>
    %22 = math.rsqrt %21 : vector<1x64xf32>
    %23 = arith.mulf %22, %7 : vector<1x64xf32>
    %24 = vector.broadcast %23 : vector<1x64xf32> to vector<128x64xf32>
    %25 = arith.mulf %14, %24 : vector<128x64xf32>
    %26 = vector.broadcast %6 : vector<1x64xf32> to vector<128x64xf32>
    %27 = arith.addf %25, %26 : vector<128x64xf32>
    %cst_12 = arith.constant 0.000000e+00 : f32
    %28 = vector.broadcast %cst_12 : f32 to vector<128x64xf32>
    %29 = arith.maximumf %27, %28 : vector<128x64xf32>
    %30 = arith.truncf %29 : vector<128x64xf32> to vector<128x64xbf16>
    %c0_i32_13 = arith.constant 0 : i32
    %31 = tpu.memref_slice %arg13[%c0_i32_13] : memref<2x!tpu.dma_semaphore, #tpu.memory_space<semaphore_mem>> -> memref<1x!tpu.dma_semaphore, #tpu.memory_space<semaphore_mem>>
    %32 = tpu.memref_squeeze %31 : memref<1x!tpu.dma_semaphore, #tpu.memory_space<semaphore_mem>> -> memref<!tpu.dma_semaphore, #tpu.memory_space<semaphore_mem>>
    tpu.wait_dma2 semaphore(%32 : memref<!tpu.dma_semaphore, #tpu.memory_space<semaphore_mem>>) src(%arg3 : memref<64x64xbf16, #tpu.memory_space<any>>) dst(%arg11 : memref<64x64xbf16, #tpu.memory_space<vmem>>)
    %c0_14 = arith.constant 0 : index
    %c0_15 = arith.constant 0 : index
    %33 = vector.load %arg11[%c0_14, %c0_15] : memref<64x64xbf16, #tpu.memory_space<vmem>>, vector<64x64xbf16>
    %c0_16 = arith.constant 0 : index
    %c0_17 = arith.constant 0 : index
    %34 = vector.load %arg8[%c0_16, %c0_17] : memref<1x64xf32, #tpu.memory_space<vmem>>, vector<1x64xf32>
    %c0_18 = arith.constant 0 : index
    %c0_19 = arith.constant 0 : index
    %35 = vector.load %arg7[%c0_18, %c0_19] : memref<1x64xf32, #tpu.memory_space<vmem>>, vector<1x64xf32>
    %cst_20 = arith.constant dense<0.000000e+00> : vector<128x64xf32>
    %36 = tpu.matmul %30, %33, %cst_20 {dimension_numbers = #tpu.dot_dimension_numbers<[1], [0], [0], [1], [0, 0, 1, 1], [], []>} : vector<128x64xbf16>, vector<64x64xbf16>, vector<128x64xf32> -> vector<128x64xf32>
    %cst_21 = arith.constant dense<0.000000e+00> : vector<64xf32>
    %37 = vector.multi_reduction <add>, %36, %cst_21 [0] : vector<128x64xf32> to vector<64xf32>
    %38 = vector.shape_cast %37 : vector<64xf32> to vector<1x64xf32>
    %cst_22 = arith.constant 7.812500e-03 : f32
    %39 = vector.broadcast %cst_22 : f32 to vector<1x64xf32>
    %40 = arith.mulf %38, %39 : vector<1x64xf32>
    %41 = vector.broadcast %40 : vector<1x64xf32> to vector<128x64xf32>
    %42 = arith.subf %36, %41 : vector<128x64xf32>
    %43 = arith.mulf %42, %42 : vector<128x64xf32>
    %cst_23 = arith.constant dense<0.000000e+00> : vector<64xf32>
    %44 = vector.multi_reduction <add>, %43, %cst_23 [0] : vector<128x64xf32> to vector<64xf32>
    %45 = vector.shape_cast %44 : vector<64xf32> to vector<1x64xf32>
    %cst_24 = arith.constant 7.812500e-03 : f32
    %46 = vector.broadcast %cst_24 : f32 to vector<1x64xf32>
    %47 = arith.mulf %45, %46 : vector<1x64xf32>
    %cst_25 = arith.constant 9.99999974E-6 : f32
    %48 = vector.broadcast %cst_25 : f32 to vector<1x64xf32>
    %49 = arith.addf %47, %48 : vector<1x64xf32>
    %50 = math.rsqrt %49 : vector<1x64xf32>
    %51 = arith.mulf %50, %35 : vector<1x64xf32>
    %52 = vector.broadcast %51 : vector<1x64xf32> to vector<128x64xf32>
    %53 = arith.mulf %42, %52 : vector<128x64xf32>
    %54 = vector.broadcast %34 : vector<1x64xf32> to vector<128x64xf32>
    %55 = arith.addf %53, %54 : vector<128x64xf32>
    %cst_26 = arith.constant 0.000000e+00 : f32
    %56 = vector.broadcast %cst_26 : f32 to vector<128x64xf32>
    %57 = arith.maximumf %55, %56 : vector<128x64xf32>
    %58 = arith.truncf %57 : vector<128x64xf32> to vector<128x64xbf16>
    %c1_i32_27 = arith.constant 1 : i32
    %59 = tpu.memref_slice %arg13[%c1_i32_27] : memref<2x!tpu.dma_semaphore, #tpu.memory_space<semaphore_mem>> -> memref<1x!tpu.dma_semaphore, #tpu.memory_space<semaphore_mem>>
    %60 = tpu.memref_squeeze %59 : memref<1x!tpu.dma_semaphore, #tpu.memory_space<semaphore_mem>> -> memref<!tpu.dma_semaphore, #tpu.memory_space<semaphore_mem>>
    tpu.wait_dma2 semaphore(%60 : memref<!tpu.dma_semaphore, #tpu.memory_space<semaphore_mem>>) src(%arg4 : memref<64x128xbf16, #tpu.memory_space<any>>) dst(%arg12 : memref<64x128xbf16, #tpu.memory_space<vmem>>)
    %c0_28 = arith.constant 0 : index
    %c0_29 = arith.constant 0 : index
    %61 = vector.load %arg12[%c0_28, %c0_29] : memref<64x128xbf16, #tpu.memory_space<vmem>>, vector<64x128xbf16>
    %c0_30 = arith.constant 0 : index
    %c0_31 = arith.constant 0 : index
    %62 = vector.load %arg9[%c0_30, %c0_31] : memref<1x128xf32, #tpu.memory_space<vmem>>, vector<1x128xf32>
    %cst_32 = arith.constant dense<0.000000e+00> : vector<128x128xf32>
    %63 = tpu.matmul %58, %61, %cst_32 {dimension_numbers = #tpu.dot_dimension_numbers<[1], [0], [0], [1], [0, 0, 1, 1], [], []>} : vector<128x64xbf16>, vector<64x128xbf16>, vector<128x128xf32> -> vector<128x128xf32>
    %cst_33 = arith.constant dense<0.000000e+00> : vector<128xf32>
    %64 = vector.multi_reduction <add>, %63, %cst_33 [0] : vector<128x128xf32> to vector<128xf32>
    %65 = vector.shape_cast %64 : vector<128xf32> to vector<1x128xf32>
    %cst_34 = arith.constant 7.812500e-03 : f32
    %66 = vector.broadcast %cst_34 : f32 to vector<1x128xf32>
    %67 = arith.mulf %65, %66 : vector<1x128xf32>
    %68 = vector.broadcast %67 : vector<1x128xf32> to vector<128x128xf32>
    %69 = arith.subf %63, %68 : vector<128x128xf32>
    %70 = arith.mulf %69, %69 : vector<128x128xf32>
    %cst_35 = arith.constant dense<0.000000e+00> : vector<128xf32>
    %71 = vector.multi_reduction <add>, %70, %cst_35 [0] : vector<128x128xf32> to vector<128xf32>
    %72 = vector.shape_cast %71 : vector<128xf32> to vector<1x128xf32>
    %cst_36 = arith.constant 7.812500e-03 : f32
    %73 = vector.broadcast %cst_36 : f32 to vector<1x128xf32>
    %74 = arith.mulf %72, %73 : vector<1x128xf32>
    %cst_37 = arith.constant 9.99999974E-6 : f32
    %75 = vector.broadcast %cst_37 : f32 to vector<1x128xf32>
    %76 = arith.addf %74, %75 : vector<1x128xf32>
    %77 = math.rsqrt %76 : vector<1x128xf32>
    %78 = arith.mulf %77, %62 : vector<1x128xf32>
    %79 = vector.broadcast %78 : vector<1x128xf32> to vector<128x128xf32>
    %80 = arith.mulf %69, %79 : vector<128x128xf32>
    %c0_38 = arith.constant 0 : index
    %c0_39 = arith.constant 0 : index
    %81 = vector.load %arg10[%c0_38, %c0_39] : memref<128x128xf32, #tpu.memory_space<vmem>>, vector<128x128xf32>
    tpu.vector_store %arg10[%c0_38, %c0_39], %80 {strides = array<i32>} : memref<128x128xf32, #tpu.memory_space<vmem>>, vector<128x128xf32>,
    return
  }
  func.func @transform_0(%arg0: i32) -> (i32, i32) {
    %c0_i32 = arith.constant 0 : i32
    %c0_i32_0 = arith.constant 0 : i32
    %c0_i32_1 = arith.constant 0 : i32
    return %c0_i32, %c0_i32_0 : i32, i32
  }
  func.func @transform_1(%arg0: i32) -> (i32, i32) {
    %c0_i32 = arith.constant 0 : i32
    %c0_i32_0 = arith.constant 0 : i32
    %c0_i32_1 = arith.constant 0 : i32
    return %c0_i32, %c0_i32_0 : i32, i32
  }
  func.func @transform_4(%arg0: i32) -> (i32, i32) {
    %c0_i32 = arith.constant 0 : i32
    %c0_i32_0 = arith.constant 0 : i32
    %c0_i32_1 = arith.constant 0 : i32
    return %c0_i32, %c0_i32_0 : i32, i32
  }
  func.func @transform_5(%arg0: i32) -> (i32, i32) {
    %c0_i32 = arith.constant 0 : i32
    %c0_i32_0 = arith.constant 0 : i32
    %c0_i32_1 = arith.constant 0 : i32
    return %c0_i32, %c0_i32_0 : i32, i32
  }
  func.func @transform_6(%arg0: i32) -> (i32, i32) {
    %c0_i32 = arith.constant 0 : i32
    %c0_i32_0 = arith.constant 0 : i32
    %c0_i32_1 = arith.constant 0 : i32
    return %c0_i32, %c0_i32_0 : i32, i32
  }
  func.func @transform_7(%arg0: i32) -> (i32, i32) {
    %c0_i32 = arith.constant 0 : i32
    %c0_i32_0 = arith.constant 0 : i32
    %c0_i32_1 = arith.constant 0 : i32
    return %c0_i32, %c0_i32_0 : i32, i32
  }
  func.func @transform_8(%arg0: i32) -> (i32, i32) {
    %c0_i32 = arith.constant 0 : i32
    %c0_i32_0 = arith.constant 0 : i32
    %c0_i32_1 = arith.constant 0 : i32
    return %c0_i32, %c0_i32_0 : i32, i32
  }
  func.func @transform_9(%arg0: i32) -> (i32, i32) {
    %c0_i32 = arith.constant 0 : i32
    %c0_i32_0 = arith.constant 0 : i32
    %c0_i32_1 = arith.constant 0 : i32
    return %c0_i32, %c0_i32_0 : i32, i32
  }
}

</mosaic_0001>

<llo_original>
// kernel: tpu_custom_call.1
$region0: #{tpu_custom_call.1}
  #allocation0 [shape = 'u32[]', space=smem, size = 0x4, offset = 0x4, fixed_abs, tag = 'smem constant byte address 0x4 - core index']
  #allocation1 [shape = 'u32[144,128]{1,0:T(1,128)}', space=vmem, size = 0x12000, scoped, tag = 'internal scratch']
  #allocation2 [shape = 'bf16[64,64]{1,0:T(16,128)(2,1)}', space=vmem, size = 0x4000, scoped, tag = 'scratch operand']
  #allocation3 [shape = 'bf16[64,128]{1,0:T(16,128)(2,1)}', space=vmem, size = 0x4000, scoped, tag = 'scratch operand']
  #allocation4 [shape = 's32[2]{0}', space=sflag, size = 0x8, scoped, tag = 'scratch operand']
  #allocation7 [shape = 's32[]', space=sflag, size = 0x4, offset = 0, fixed_abs, tag = 'sflag constant byte address 0x0 - dummy sync flag']
  #allocation8 [shape = 's32[]', space=sflag, size = 0x4, offset = 0, fixed_abs, tag = 'sflag constant byte address 0x0 - dummy sync flag']
  %s0 = inlined_call_operand.vmem [shape: bf16[128,64], index: 0, kind: input, shape index: {}]
  %s1 = inlined_call_operand.vmem [shape: bf16[64,64], index: 1, kind: input, shape index: {}]
  %s2 = inlined_call_operand.vmem [shape: bf16[64,64], index: 2, kind: input, shape index: {}]
  %s3 = inlined_call_operand.vmem [shape: bf16[64,128], index: 3, kind: input, shape index: {}]
  %s4 = inlined_call_operand.vmem [shape: f32[1,64], index: 4, kind: input, shape index: {}]
  %s5 = inlined_call_operand.vmem [shape: f32[1,64], index: 5, kind: input, shape index: {}]
  %s6 = inlined_call_operand.vmem [shape: f32[1,64], index: 6, kind: input, shape index: {}]
  %s7 = inlined_call_operand.vmem [shape: f32[1,64], index: 7, kind: input, shape index: {}]
  %s8 = inlined_call_operand.vmem [shape: f32[1,128], index: 8, kind: input, shape index: {}]
  %s9 = inlined_call_operand.hbm [shape: f32[128,128], index: 9, kind: output, shape index: {}]
  %s10 = sld [smem:[#allocation0]]
  $region106: #{tpu_custom_call.1} parent=0
    _
  %s12 = ssub.s32 1, %s10
  %s13 = scalar_select 0, %s12, %s10
  $region1: #{tpu_custom_call.1} parent=0
    #allocation5 [shape = 'u8[65536]{0}', space=vmem, size = 0x10000, scoped, tag = 'output window, operand 0, single buffered']
    #allocation6 [shape = 's32[1]{0}', space=sflag, size = 0x4, scoped, tag = 'scoped memory for tpu_custom_call.1']
    %14 = vsyncpa [#allocation6], 0
    // Predicated region
    $region2: #{tpu_custom_call.1} parent=1 // pred_check
      _
    $region3: #{tpu_custom_call.1} parent=1 // pred_check_branch
      %16 = sbr.rel (0) target = $region5
    $region4: #{tpu_custom_call.1} parent=1 // pred_region
      _
    $region5: #{tpu_custom_call.1} parent=1 // pred_fallthru
      _
    // Predicated region
    $region6: #{tpu_custom_call.1} parent=1 // pred_check
      _
    $region7: #{tpu_custom_call.1} parent=1 // pred_check_branch
      %18 = sbr.rel (0) target = $region9
    $region8: #{tpu_custom_call.1} parent=1 // pred_region
      _
    $region9: #{tpu_custom_call.1} parent=1 // pred_fallthru
      _
    // Predicated region
    $region10: #{tpu_custom_call.1} parent=1 // pred_check
      _
    $region11: #{tpu_custom_call.1} parent=1 // pred_check_branch
      %20 = sbr.rel (0) target = $region13
    $region12: #{tpu_custom_call.1} parent=1 // pred_region
      _
    $region13: #{tpu_custom_call.1} parent=1 // pred_fallthru
      _
    // Predicated region
    $region14: #{tpu_custom_call.1} parent=1 // pred_check
      _
    $region15: #{tpu_custom_call.1} parent=1 // pred_check_branch
      %22 = sbr.rel (0) target = $region17
    $region16: #{tpu_custom_call.1} parent=1 // pred_region
      _
    $region17: #{tpu_custom_call.1} parent=1 // pred_fallthru
      _
    // Predicated region
    $region18: #{tpu_custom_call.1} parent=1 // pred_check
      _
    $region19: #{tpu_custom_call.1} parent=1 // pred_check_branch
      %24 = sbr.rel (0) target = $region21
    $region20: #{tpu_custom_call.1} parent=1 // pred_region
      _
    $region21: #{tpu_custom_call.1} parent=1 // pred_fallthru
      _
    // Predicated region
    $region22: #{tpu_custom_call.1} parent=1 // pred_check
      _
    $region23: #{tpu_custom_call.1} parent=1 // pred_check_branch
      %26 = sbr.rel (0) target = $region25
    $region24: #{tpu_custom_call.1} parent=1 // pred_region
      _
    $region25: #{tpu_custom_call.1} parent=1 // pred_fallthru
      _
    // Predicated region
    $region26: #{tpu_custom_call.1} parent=1 // pred_check
      _
    $region27: #{tpu_custom_call.1} parent=1 // pred_check_branch
      %28 = sbr.rel (0) target = $region29
    $region28: #{tpu_custom_call.1} parent=1 // pred_region
      _
    $region29: #{tpu_custom_call.1} parent=1 // pred_fallthru
      _
    %p31 = scmp.lt.u32.totalorder 32, 8
    %p32 = pneg %p31
    // Predicated region
    $region30: #{tpu_custom_call.1} parent=1 // pred_check
      _
    $region31: #{tpu_custom_call.1} parent=1 // pred_check_branch
      %34 = sbr.rel (%p31) target = $region33
    $region32: #{tpu_custom_call.1} parent=1 // pred_region
      %s49 = sand.u32 32, 7
      %p50 = scmp.eq.s32.totalorder %s49, 0
      // Predicated region
      $region45: #{tpu_custom_call.1} parent=32 // pred_check
        %p51 = pneg %p50
      $region46: #{tpu_custom_call.1} parent=32 // pred_check_branch
        %53 = sbr.rel (%p51) target = $region48
      $region47: #{tpu_custom_call.1} parent=32 // pred_region
        loop: start=0, step=1, limit=1
        $region49: #{tpu_custom_call.1} parent=47 // loop_pre_header
          _
        $region50: #{tpu_custom_call.1} parent=47 // loop_header
          %s55 = sphi 0, %s59
          %p56 = scmp.ge.s32.totalorder %s55, 1
          %s60 = sphi %s2, %s2
          %s61 = sphi [#allocation2], [#allocation2]
        $region51: #{tpu_custom_call.1} parent=47 // loop_header_branch
          %58 = sbr.rel (%p56) target = $region55
        $region52: #{tpu_custom_call.1} parent=47 // loop_body
          %v62 = vld [vmem:[%s60] sm:$0xff]
          %63 = vst [vmem:[%s61] sm:$0xff] %v62
          %v64 = vld [vmem:[%s60 + $0x8] sm:$0xff]
          %65 = vst [vmem:[%s61 + $0x8] sm:$0xff] %v64
          %v66 = vld [vmem:[%s60 + $0x10] sm:$0xff]
          %67 = vst [vmem:[%s61 + $0x10] sm:$0xff] %v66
          %v68 = vld [vmem:[%s60 + $0x18] sm:$0xff]
          %69 = vst [vmem:[%s61 + $0x18] sm:$0xff] %v68
        $region53: #{tpu_custom_call.1} parent=47 // loop_footer
          %s59 = sadd.s32 1, %s55
        $region54: #{tpu_custom_call.1} parent=47 // loop_footer_branch
          %54 = sbr.rel target = $region50
        $region55: #{tpu_custom_call.1} parent=47 // loop_exit
          _
      $region48: #{tpu_custom_call.1} parent=32 // pred_fallthru
        _
      %p70 = pneg %p50
      // Predicated region
      $region56: #{tpu_custom_call.1} parent=32 // pred_check
        _
      $region57: #{tpu_custom_call.1} parent=32 // pred_check_branch
        %72 = sbr.rel (%p50) target = $region59
      $region58: #{tpu_custom_call.1} parent=32 // pred_region
        %s73 = sand.u32 32, 7
      $region59: #{tpu_custom_call.1} parent=32 // pred_fallthru
        _
    $region33: #{tpu_custom_call.1} parent=1 // pred_fallthru
      _
    // Predicated region
    $region34: #{tpu_custom_call.1} parent=1 // pred_check
      %p35 = pneg %p31
    $region35: #{tpu_custom_call.1} parent=1 // pred_check_branch
      %37 = sbr.rel (%p35) target = $region37
    $region36: #{tpu_custom_call.1} parent=1 // pred_region
      %s38 = sshllo.u32 0, 32
      loop: start=0, step=1, limit=1
      $region38: #{tpu_custom_call.1} parent=36 // loop_pre_header
        _
      $region39: #{tpu_custom_call.1} parent=36 // loop_header
        %s40 = sphi 0, %s44
        %p41 = scmp.ge.s32.totalorder %s40, 1
        %s45 = sphi %s2, %s2
        %s46 = sphi [#allocation2], [#allocation2]
      $region40: #{tpu_custom_call.1} parent=36 // loop_header_branch
        %43 = sbr.rel (%p41) target = $region44
      $region41: #{tpu_custom_call.1} parent=36 // loop_body
        %v47 = vld [vmem:[%s45] sm:%s38]
        %48 = vst [vmem:[%s46] sm:%s38] %v47
      $region42: #{tpu_custom_call.1} parent=36 // loop_footer
        %s44 = sadd.s32 1, %s40
      $region43: #{tpu_custom_call.1} parent=36 // loop_footer_branch
        %39 = sbr.rel target = $region39
      $region44: #{tpu_custom_call.1} parent=36 // loop_exit
        _
    $region37: #{tpu_custom_call.1} parent=1 // pred_fallthru
      _
    // Predicated region
    $region60: #{tpu_custom_call.1} parent=1 // pred_check
      _
    $region61: #{tpu_custom_call.1} parent=1 // pred_check_branch
      %76 = sbr.rel (0) target = $region63
    $region62: #{tpu_custom_call.1} parent=1 // pred_region
      %77 = vsyncadd [#allocation4], 512
    $region63: #{tpu_custom_call.1} parent=1 // pred_fallthru
      _
    %s78 = scalar_lea.sflag [#allocation4], 1
    %p80 = scmp.lt.u32.totalorder 32, 8
    %p81 = pneg %p80
    // Predicated region
    $region64: #{tpu_custom_call.1} parent=1 // pred_check
      _
    $region65: #{tpu_custom_call.1} parent=1 // pred_check_branch
      %83 = sbr.rel (%p80) target = $region67
    $region66: #{tpu_custom_call.1} parent=1 // pred_region
      %s98 = sand.u32 32, 7
      %p99 = scmp.eq.s32.totalorder %s98, 0
      // Predicated region
      $region79: #{tpu_custom_call.1} parent=66 // pred_check
        %p100 = pneg %p99
      $region80: #{tpu_custom_call.1} parent=66 // pred_check_branch
        %102 = sbr.rel (%p100) target = $region82
      $region81: #{tpu_custom_call.1} parent=66 // pred_region
        loop: start=0, step=1, limit=1
        $region83: #{tpu_custom_call.1} parent=81 // loop_pre_header
          _
        $region84: #{tpu_custom_call.1} parent=81 // loop_header
          %s104 = sphi 0, %s108
          %p105 = scmp.ge.s32.totalorder %s104, 1
          %s109 = sphi %s3, %s3
          %s110 = sphi [#allocation3], [#allocation3]
        $region85: #{tpu_custom_call.1} parent=81 // loop_header_branch
          %107 = sbr.rel (%p105) target = $region89
        $region86: #{tpu_custom_call.1} parent=81 // loop_body
          %v111 = vld [vmem:[%s109] sm:$0xff]
          %112 = vst [vmem:[%s110] sm:$0xff] %v111
          %v113 = vld [vmem:[%s109 + $0x8] sm:$0xff]
          %114 = vst [vmem:[%s110 + $0x8] sm:$0xff] %v113
          %v115 = vld [vmem:[%s109 + $0x10] sm:$0xff]
          %116 = vst [vmem:[%s110 + $0x10] sm:$0xff] %v115
          %v117 = vld [vmem:[%s109 + $0x18] sm:$0xff]
          %118 = vst [vmem:[%s110 + $0x18] sm:$0xff] %v117
        $region87: #{tpu_custom_call.1} parent=81 // loop_footer
          %s108 = sadd.s32 1, %s104
        $region88: #{tpu_custom_call.1} parent=81 // loop_footer_branch
          %103 = sbr.rel target = $region84
        $region89: #{tpu_custom_call.1} parent=81 // loop_exit
          _
      $region82: #{tpu_custom_call.1} parent=66 // pred_fallthru
        _
      %p119 = pneg %p99
      // Predicated region
      $region90: #{tpu_custom_call.1} parent=66 // pred_check
        _
      $region91: #{tpu_custom_call.1} parent=66 // pred_check_branch
        %121 = sbr.rel (%p99) target = $region93
      $region92: #{tpu_custom_call.1} parent=66 // pred_region
        %s122 = sand.u32 32, 7
      $region93: #{tpu_custom_call.1} parent=66 // pred_fallthru
        _
    $region67: #{tpu_custom_call.1} parent=1 // pred_fallthru
      _
    // Predicated region
    $region68: #{tpu_custom_call.1} parent=1 // pred_check
      %p84 = pneg %p80
    $region69: #{tpu_custom_call.1} parent=1 // pred_check_branch
      %86 = sbr.rel (%p84) target = $region71
    $region70: #{tpu_custom_call.1} parent=1 // pred_region
      %s87 = sshllo.u32 0, 32
      loop: start=0, step=1, limit=1
      $region72: #{tpu_custom_call.1} parent=70 // loop_pre_header
        _
      $region73: #{tpu_custom_call.1} parent=70 // loop_header
        %s89 = sphi 0, %s93
        %p90 = scmp.ge.s32.totalorder %s89, 1
        %s94 = sphi %s3, %s3
        %s95 = sphi [#allocation3], [#allocation3]
      $region74: #{tpu_custom_call.1} parent=70 // loop_header_branch
        %92 = sbr.rel (%p90) target = $region78
      $region75: #{tpu_custom_call.1} parent=70 // loop_body
        %v96 = vld [vmem:[%s94] sm:%s87]
        %97 = vst [vmem:[%s95] sm:%s87] %v96
      $region76: #{tpu_custom_call.1} parent=70 // loop_footer
        %s93 = sadd.s32 1, %s89
      $region77: #{tpu_custom_call.1} parent=70 // loop_footer_branch
        %88 = sbr.rel target = $region73
      $region78: #{tpu_custom_call.1} parent=70 // loop_exit
        _
    $region71: #{tpu_custom_call.1} parent=1 // pred_fallthru
      _
    // Predicated region
    $region94: #{tpu_custom_call.1} parent=1 // pred_check
      _
    $region95: #{tpu_custom_call.1} parent=1 // pred_check_branch
      %125 = sbr.rel (0) target = $region97
    $region96: #{tpu_custom_call.1} parent=1 // pred_region
      %126 = vsyncadd %s78, 512
    $region97: #{tpu_custom_call.1} parent=1 // pred_fallthru
      _
    %v127 = vld [vmem:[%s0] sm:$0xf]
    %v128 = vld [vmem:[%s0 + $0x4] sm:$0xf]
    %v129 = vld [vmem:[%s0 + $0x8] sm:$0xf]
    %v130 = vld [vmem:[%s0 + $0xc] sm:$0xf]
    %v131 = vld [vmem:[%s0 + $0x10] sm:$0xf]
    %v132 = vld [vmem:[%s0 + $0x14] sm:$0xf]
    %v133 = vld [vmem:[%s0 + $0x18] sm:$0xf]
    %v134 = vld [vmem:[%s0 + $0x1c] sm:$0xf]
    %v135 = vld [vmem:[%s0 + $0x20] sm:$0xf]
    %v136 = vld [vmem:[%s0 + $0x24] sm:$0xf]
    %v137 = vld [vmem:[%s0 + $0x28] sm:$0xf]
    %v138 = vld [vmem:[%s0 + $0x2c] sm:$0xf]
    %v139 = vld [vmem:[%s0 + $0x30] sm:$0xf]
    %v140 = vld [vmem:[%s0 + $0x34] sm:$0xf]
    %v141 = vld [vmem:[%s0 + $0x38] sm:$0xf]
    %v142 = vld [vmem:[%s0 + $0x3c] sm:$0xf]
    %v143 = vld [vmem:[%s1] sm:$0xf]
    %v144 = vld [vmem:[%s1 + $0x4] sm:$0xf]
    %v145 = vld [vmem:[%s1 + $0x8] sm:$0xf]
    %v146 = vld [vmem:[%s1 + $0xc] sm:$0xf]
    %v147 = vld [vmem:[%s1 + $0x10] sm:$0xf]
    %v148 = vld [vmem:[%s1 + $0x14] sm:$0xf]
    %v149 = vld [vmem:[%s1 + $0x18] sm:$0xf]
    %v150 = vld [vmem:[%s1 + $0x1c] sm:$0xf]
    %v151 = vld [vmem:[%s5] sm:$0x1]
    %v152 = vld [vmem:[%s4] sm:$0x1]
    %v169 = vunpack.c.l.b16 %v127
    %v170 = vunpack.c.l.b16 %v128
    %v171 = vunpack.c.l.b16 %v129
    %v172 = vunpack.c.l.b16 %v130
    %v173 = vunpack.c.l.b16 %v131
    %v174 = vunpack.c.l.b16 %v132
    %v175 = vunpack.c.l.b16 %v133
    %v176 = vunpack.c.l.b16 %v134
    %v177 = vunpack.c.l.b16 %v135
    %v178 = vunpack.c.l.b16 %v136
    %v179 = vunpack.c.l.b16 %v137
    %v180 = vunpack.c.l.b16 %v138
    %v181 = vunpack.c.l.b16 %v139
    %v182 = vunpack.c.l.b16 %v140
    %v183 = vunpack.c.l.b16 %v141
    %v184 = vunpack.c.l.b16 %v142
    %v185 = vpack.c.b16 %v170, %v169
    %v186 = vpack.c.b16 %v172, %v171
    %v187 = vpack.c.b16 %v174, %v173
    %v188 = vpack.c.b16 %v176, %v175
    %v189 = vpack.c.b16 %v178, %v177
    %v190 = vpack.c.b16 %v180, %v179
    %v191 = vpack.c.b16 %v182, %v181
    %v192 = vpack.c.b16 %v184, %v183
    %v201 = vunpack.c.l.b16 %v143
    %v202 = vunpack.c.l.b16 %v144
    %v203 = vunpack.c.l.b16 %v145
    %v204 = vunpack.c.l.b16 %v146
    %v205 = vunpack.c.l.b16 %v147
    %v206 = vunpack.c.l.b16 %v148
    %v207 = vunpack.c.l.b16 %v149
    %v208 = vunpack.c.l.b16 %v150
    %v209 = vpack.c.b16 %v202, %v201
    %v210 = vpack.c.b16 %v204, %v203
    %v211 = vpack.c.b16 %v206, %v205
    %v212 = vpack.c.b16 %v208, %v207
    %vm217 = vcmask 523264
    %v219 = vsel %vm217, %v185, 0
    %v222 = vsel %vm217, %v186, 0
    %v225 = vsel %vm217, %v187, 0
    %v228 = vsel %vm217, %v188, 0
    %v231 = vsel %vm217, %v189, 0
    %v234 = vsel %vm217, %v190, 0
    %v237 = vsel %vm217, %v191, 0
    %v240 = vsel %vm217, %v192, 0
    %242 = vmatprep.subr.bf16.mxu0 0
    %243 = vmatpush1.bf16.msra.mxu0 %v209
    %244 = vmatprep.subr.bf16.mxu0 0
    %245 = vmatpush1.bf16.msra.mxu0 %v210
    %246 = vmatprep.subr.bf16.mxu0 0
    %247 = vmatpush1.bf16.msra.mxu0 %v211
    %248 = vmatprep.subr.bf16.mxu0 0
    %249 = vmatpush1.bf16.msra.mxu0 %v212
    %250 = vmatprep.subr.bf16.mxu0 0
    %251 = vmatpush1.bf16.msra.mxu0 0
    %252 = vmatprep.subr.bf16.mxu0 0
    %253 = vmatpush1.bf16.msra.mxu0 0
    %254 = vmatprep.subr.bf16.mxu0 0
    %255 = vmatpush1.bf16.msra.mxu0 0
    %256 = vmatprep.subr.bf16.mxu0 0
    %257 = vmatpush1.bf16.msra.mxu0 0
    %258 = vmatprep.subr.bf16.mxu0 0
    %259 = vmatpush1.bf16.msra.mxu0 0
    %260 = vmatprep.subr.bf16.mxu0 0
    %261 = vmatpush1.bf16.msra.mxu0 0
    %262 = vmatprep.subr.bf16.mxu0 0
    %263 = vmatpush1.bf16.msra.mxu0 0
    %264 = vmatprep.subr.bf16.mxu0 0
    %265 = vmatpush1.bf16.msra.mxu0 0
    %266 = vmatprep.subr.bf16.mxu0 0
    %267 = vmatpush1.bf16.msra.mxu0 0
    %268 = vmatprep.subr.bf16.mxu0 0
    %269 = vmatpush1.bf16.msra.mxu0 0
    %270 = vmatprep.subr.bf16.mxu0 0
    %271 = vmatpush1.bf16.msra.mxu0 0
    %272 = vmatprep.subr.bf16.mxu0 0
    %273 = vmatpush1.bf16.msra.mxu0 0
    %274 = vmatprep.mubr.bf16.mxu0 0
    %275 = vmatmul.mubr.bf16.gmra.mrb[0].mxu0 %v219
    %v276 = vpop.f32.mrb[0].mxu0
    %v277 = vadd.f32 0.0, %v276
    %v278 = vpop.f32.mrb[0].mxu0
    %v279 = vpop.f32.mrb[0].mxu0
    %v280 = vadd.f32 0.0, %v279
    %v281 = vpop.f32.mrb[0].mxu0
    %282 = vmatprep.mubr.bf16.mxu0 0
    %283 = vmatmul.mubr.bf16.gmra.mrb[0].mxu0 %v222
    %v284 = vpop.f32.mrb[0].mxu0
    %v285 = vadd.f32 0.0, %v284
    %v286 = vpop.f32.mrb[0].mxu0
    %v287 = vpop.f32.mrb[0].mxu0
    %v288 = vadd.f32 0.0, %v287
    %v289 = vpop.f32.mrb[0].mxu0
    %290 = vmatprep.mubr.bf16.mxu0 0
    %291 = vmatmul.mubr.bf16.gmra.mrb[0].mxu0 %v225
    %v292 = vpop.f32.mrb[0].mxu0
    %v293 = vadd.f32 0.0, %v292
    %v294 = vpop.f32.mrb[0].mxu0
    %v295 = vpop.f32.mrb[0].mxu0
    %v296 = vadd.f32 0.0, %v295
    %v297 = vpop.f32.mrb[0].mxu0
    %298 = vmatprep.mubr.bf16.mxu0 0
    %299 = vmatmul.mubr.bf16.gmra.mrb[0].mxu0 %v228
    %v300 = vpop.f32.mrb[0].mxu0
    %v301 = vadd.f32 0.0, %v300
    %v302 = vpop.f32.mrb[0].mxu0
    %v303 = vpop.f32.mrb[0].mxu0
    %v304 = vadd.f32 0.0, %v303
    %v305 = vpop.f32.mrb[0].mxu0
    %306 = vmatprep.mubr.bf16.mxu0 0
    %307 = vmatmul.mubr.bf16.gmra.mrb[0].mxu0 %v231
    %v308 = vpop.f32.mrb[0].mxu0
    %v309 = vadd.f32 0.0, %v308
    %v310 = vpop.f32.mrb[0].mxu0
    %v311 = vpop.f32.mrb[0].mxu0
    %v312 = vadd.f32 0.0, %v311
    %v313 = vpop.f32.mrb[0].mxu0
    %314 = vmatprep.mubr.bf16.mxu0 0
    %315 = vmatmul.mubr.bf16.gmra.mrb[0].mxu0 %v234
    %v316 = vpop.f32.mrb[0].mxu0
    %v317 = vadd.f32 0.0, %v316
    %v318 = vpop.f32.mrb[0].mxu0
    %v319 = vpop.f32.mrb[0].mxu0
    %v320 = vadd.f32 0.0, %v319
    %v321 = vpop.f32.mrb[0].mxu0
    %322 = vmatprep.mubr.bf16.mxu0 0
    %323 = vmatmul.mubr.bf16.gmra.mrb[0].mxu0 %v237
    %v324 = vpop.f32.mrb[0].mxu0
    %v325 = vadd.f32 0.0, %v324
    %v326 = vpop.f32.mrb[0].mxu0
    %v327 = vpop.f32.mrb[0].mxu0
    %v328 = vadd.f32 0.0, %v327
    %v329 = vpop.f32.mrb[0].mxu0
    %330 = vmatprep.mubr.bf16.mxu0 0
    %331 = vmatmul.mubr.bf16.gmra.mrb[0].mxu0 %v240
    %v332 = vpop.f32.mrb[0].mxu0
    %v333 = vadd.f32 0.0, %v332
    %v334 = vpop.f32.mrb[0].mxu0
    %v335 = vpop.f32.mrb[0].mxu0
    %v336 = vadd.f32 0.0, %v335
    %v337 = vpop.f32.mrb[0].mxu0
    %338 = vdwg.mxu0
    %v339 = vsel %vm217, %v277, 0.0
    %v340 = vsel %vm217, %v280, 0.0
    %v341 = vadd.f32 %v339, %v340
    %v342 = vsel %vm217, %v285, 0.0
    %v343 = vadd.f32 %v341, %v342
    %v344 = vsel %vm217, %v288, 0.0
    %v345 = vadd.f32 %v343, %v344
    %v346 = vsel %vm217, %v293, 0.0
    %v347 = vadd.f32 %v345, %v346
    %v348 = vsel %vm217, %v296, 0.0
    %v349 = vadd.f32 %v347, %v348
    %v350 = vsel %vm217, %v301, 0.0
    %v351 = vadd.f32 %v349, %v350
    %v352 = vsel %vm217, %v304, 0.0
    %v353 = vadd.f32 %v351, %v352
    %v354 = vsel %vm217, %v309, 0.0
    %v355 = vadd.f32 %v353, %v354
    %v356 = vsel %vm217, %v312, 0.0
    %v357 = vadd.f32 %v355, %v356
    %v358 = vsel %vm217, %v317, 0.0
    %v359 = vadd.f32 %v357, %v358
    %v360 = vsel %vm217, %v320, 0.0
    %v361 = vadd.f32 %v359, %v360
    %v362 = vsel %vm217, %v325, 0.0
    %v363 = vadd.f32 %v361, %v362
    %v364 = vsel %vm217, %v328, 0.0
    %v365 = vadd.f32 %v363, %v364
    %v366 = vsel %vm217, %v333, 0.0
    %v367 = vadd.f32 %v365, %v366
    %v368 = vsel %vm217, %v336, 0.0
    %v369 = vadd.f32 %v367, %v368
    %v370 = vrot.slane %v369, 4
    %v371 = vadd.f32 %v369, %v370
    %v372 = vrot.slane %v371, 2
    %v373 = vadd.f32 %v371, %v372
    %v374 = vrot.slane %v373, 1
    %v375 = vadd.f32 %v373, %v374
    %v376 = vmul.f32 %v375, 0.0078125
    %v377 = vsub.f32 %v277, %v376
    %v378 = vsub.f32 %v280, %v376
    %v379 = vsub.f32 %v285, %v376
    %v380 = vsub.f32 %v288, %v376
    %v381 = vsub.f32 %v293, %v376
    %v382 = vsub.f32 %v296, %v376
    %v383 = vsub.f32 %v301, %v376
    %v384 = vsub.f32 %v304, %v376
    %v385 = vsub.f32 %v309, %v376
    %v386 = vsub.f32 %v312, %v376
    %v387 = vsub.f32 %v317, %v376
    %v388 = vsub.f32 %v320, %v376
    %v389 = vsub.f32 %v325, %v376
    %v390 = vsub.f32 %v328, %v376
    %v391 = vsub.f32 %v333, %v376
    %v392 = vsub.f32 %v336, %v376
    %v393 = vmul.f32 %v377, %v377
    %v394 = vmul.f32 %v378, %v378
    %v395 = vmul.f32 %v379, %v379
    %v396 = vmul.f32 %v380, %v380
    %v397 = vmul.f32 %v381, %v381
    %v398 = vmul.f32 %v382, %v382
    %v399 = vmul.f32 %v383, %v383
    %v400 = vmul.f32 %v384, %v384
    %v401 = vmul.f32 %v385, %v385
    %v402 = vmul.f32 %v386, %v386
    %v403 = vmul.f32 %v387, %v387
    %v404 = vmul.f32 %v388, %v388
    %v405 = vmul.f32 %v389, %v389
    %v406 = vmul.f32 %v390, %v390
    %v407 = vmul.f32 %v391, %v391
    %v408 = vmul.f32 %v392, %v392
    %v409 = vsel %vm217, %v393, 0.0
    %v410 = vsel %vm217, %v394, 0.0
    %v411 = vadd.f32 %v409, %v410
    %v412 = vsel %vm217, %v395, 0.0
    %v413 = vadd.f32 %v411, %v412
    %v414 = vsel %vm217, %v396, 0.0
    %v415 = vadd.f32 %v413, %v414
    %v416 = vsel %vm217, %v397, 0.0
    %v417 = vadd.f32 %v415, %v416
    %v418 = vsel %vm217, %v398, 0.0
    %v419 = vadd.f32 %v417, %v418
    %v420 = vsel %vm217, %v399, 0.0
    %v421 = vadd.f32 %v419, %v420
    %v422 = vsel %vm217, %v400, 0.0
    %v423 = vadd.f32 %v421, %v422
    %v424 = vsel %vm217, %v401, 0.0
    %v425 = vadd.f32 %v423, %v424
    %v426 = vsel %vm217, %v402, 0.0
    %v427 = vadd.f32 %v425, %v426
    %v428 = vsel %vm217, %v403, 0.0
    %v429 = vadd.f32 %v427, %v428
    %v430 = vsel %vm217, %v404, 0.0
    %v431 = vadd.f32 %v429, %v430
    %v432 = vsel %vm217, %v405, 0.0
    %v433 = vadd.f32 %v431, %v432
    %v434 = vsel %vm217, %v406, 0.0
    %v435 = vadd.f32 %v433, %v434
    %v436 = vsel %vm217, %v407, 0.0
    %v437 = vadd.f32 %v435, %v436
    %v438 = vsel %vm217, %v408, 0.0
    %v439 = vadd.f32 %v437, %v438
    %v440 = vrot.slane %v439, 4
    %v441 = vadd.f32 %v439, %v440
    %v442 = vrot.slane %v441, 2
    %v443 = vadd.f32 %v441, %v442
    %v444 = vrot.slane %v443, 1
    %v445 = vadd.f32 %v443, %v444
    %v446 = vmul.f32 %v445, 0.0078125
    %v447 = vadd.f32 %v446, 1e-05
    %v448 = vrsqrt.pop %v447
    %v449 = vmul.f32 %v448, %v152
    %v450 = vlaneseq
    %v451 = vshrl.u32 %v450, 7
    %v452 = vsub.s32 0, %v451
    %v453 = vrot.slane %v449, %v452
    %v454 = vmul.f32 %v377, %v453
    %v455 = vmul.f32 %v378, %v453
    %v456 = vmul.f32 %v379, %v453
    %v457 = vmul.f32 %v380, %v453
    %v458 = vmul.f32 %v381, %v453
    %v459 = vmul.f32 %v382, %v453
    %v460 = vmul.f32 %v383, %v453
    %v461 = vmul.f32 %v384, %v453
    %v462 = vmul.f32 %v385, %v453
    %v463 = vmul.f32 %v386, %v453
    %v464 = vmul.f32 %v387, %v453
    %v465 = vmul.f32 %v388, %v453
    %v466 = vmul.f32 %v389, %v453
    %v467 = vmul.f32 %v390, %v453
    %v468 = vmul.f32 %v391, %v453
    %v469 = vmul.f32 %v392, %v453
    %v471 = vlaneseq
    %v472 = vshrl.u32 %v471, 7
    %v473 = vsub.s32 0, %v472
    %v474 = vrot.slane %v151, %v473
    %v476 = vadd.f32 %v454, %v474
    %v477 = vadd.f32 %v455, %v474
    %v478 = vadd.f32 %v456, %v474
    %v479 = vadd.f32 %v457, %v474
    %v480 = vadd.f32 %v458, %v474
    %v481 = vadd.f32 %v459, %v474
    %v482 = vadd.f32 %v460, %v474
    %v483 = vadd.f32 %v461, %v474
    %v484 = vadd.f32 %v462, %v474
    %v485 = vadd.f32 %v463, %v474
    %v486 = vadd.f32 %v464, %v474
    %v487 = vadd.f32 %v465, %v474
    %v488 = vadd.f32 %v466, %v474
    %v489 = vadd.f32 %v467, %v474
    %v490 = vadd.f32 %v468, %v474
    %v491 = vadd.f32 %v469, %v474
    %v492 = vmax.f32 %v476, 0.0
    %v493 = vmax.f32 %v477, 0.0
    %v494 = vmax.f32 %v478, 0.0
    %v495 = vmax.f32 %v479, 0.0
    %v496 = vmax.f32 %v480, 0.0
    %v497 = vmax.f32 %v481, 0.0
    %v498 = vmax.f32 %v482, 0.0
    %v499 = vmax.f32 %v483, 0.0
    %v500 = vmax.f32 %v484, 0.0
    %v501 = vmax.f32 %v485, 0.0
    %v502 = vmax.f32 %v486, 0.0
    %v503 = vmax.f32 %v487, 0.0
    %v504 = vmax.f32 %v488, 0.0
    %v505 = vmax.f32 %v489, 0.0
    %v506 = vmax.f32 %v490, 0.0
    %v507 = vmax.f32 %v491, 0.0
    %v508 = vpack.c.bf16 %v493, %v492
    %v509 = vpack.c.bf16 %v495, %v494
    %v510 = vpack.c.bf16 %v497, %v496
    %v511 = vpack.c.bf16 %v499, %v498
    %v512 = vpack.c.bf16 %v501, %v500
    %v513 = vpack.c.bf16 %v503, %v502
    %v514 = vpack.c.bf16 %v505, %v504
    %v515 = vpack.c.bf16 %v507, %v506
    %s516 = smul.u32 4, 8
    %s517 = smul.u32 %s516, 1
    %s518 = sshll.u32 %s517, 4
    %519 = dma.done [#allocation4], %s518
    %v520 = vld [vmem:[#allocation2] sm:$0xff]
    %v521 = vld [vmem:[#allocation2 + $0x8] sm:$0xff]
    %v522 = vld [vmem:[#allocation2 + $0x10] sm:$0xff]
    %v523 = vld [vmem:[#allocation2 + $0x18] sm:$0xff]
    %v524 = vld [vmem:[%s7] sm:$0x1]
    %v525 = vld [vmem:[%s6] sm:$0x1]
    %v527 = vsel %vm217, %v508, 0
    %v530 = vsel %vm217, %v509, 0
    %v533 = vsel %vm217, %v510, 0
    %v536 = vsel %vm217, %v511, 0
    %v539 = vsel %vm217, %v512, 0
    %v542 = vsel %vm217, %v513, 0
    %v545 = vsel %vm217, %v514, 0
    %v548 = vsel %vm217, %v515, 0
    %550 = vmatprep.subr.bf16.mxu0 0
    %551 = vmatpush1.bf16.msra.mxu0 %v520
    %552 = vmatprep.subr.bf16.mxu0 0
    %553 = vmatpush1.bf16.msra.mxu0 %v521
    %554 = vmatprep.subr.bf16.mxu0 0
    %555 = vmatpush1.bf16.msra.mxu0 %v522
    %556 = vmatprep.subr.bf16.mxu0 0
    %557 = vmatpush1.bf16.msra.mxu0 %v523
    %558 = vmatprep.subr.bf16.mxu0 0
    %559 = vmatpush1.bf16.msra.mxu0 0
    %560 = vmatprep.subr.bf16.mxu0 0
    %561 = vmatpush1.bf16.msra.mxu0 0
    %562 = vmatprep.subr.bf16.mxu0 0
    %563 = vmatpush1.bf16.msra.mxu0 0
    %564 = vmatprep.subr.bf16.mxu0 0
    %565 = vmatpush1.bf16.msra.mxu0 0
    %566 = vmatprep.subr.bf16.mxu0 0
    %567 = vmatpush1.bf16.msra.mxu0 0
    %568 = vmatprep.subr.bf16.mxu0 0
    %569 = vmatpush1.bf16.msra.mxu0 0
    %570 = vmatprep.subr.bf16.mxu0 0
    %571 = vmatpush1.bf16.msra.mxu0 0
    %572 = vmatprep.subr.bf16.mxu0 0
    %573 = vmatpush1.bf16.msra.mxu0 0
    %574 = vmatprep.subr.bf16.mxu0 0
    %575 = vmatpush1.bf16.msra.mxu0 0
    %576 = vmatprep.subr.bf16.mxu0 0
    %577 = vmatpush1.bf16.msra.mxu0 0
    %578 = vmatprep.subr.bf16.mxu0 0
    %579 = vmatpush1.bf16.msra.mxu0 0
    %580 = vmatprep.subr.bf16.mxu0 0
    %581 = vmatpush1.bf16.msra.mxu0 0
    %582 = vmatprep.mubr.bf16.mxu0 0
    %583 = vmatmul.mubr.bf16.gmra.mrb[0].mxu0 %v527
    %v584 = vpop.f32.mrb[0].mxu0
    %v585 = vadd.f32 0.0, %v584
    %v586 = vpop.f32.mrb[0].mxu0
    %v587 = vpop.f32.mrb[0].mxu0
    %v588 = vadd.f32 0.0, %v587
    %v589 = vpop.f32.mrb[0].mxu0
    %590 = vmatprep.mubr.bf16.mxu0 0
    %591 = vmatmul.mubr.bf16.gmra.mrb[0].mxu0 %v530
    %v592 = vpop.f32.mrb[0].mxu0
    %v593 = vadd.f32 0.0, %v592
    %v594 = vpop.f32.mrb[0].mxu0
    %v595 = vpop.f32.mrb[0].mxu0
    %v596 = vadd.f32 0.0, %v595
    %v597 = vpop.f32.mrb[0].mxu0
    %598 = vmatprep.mubr.bf16.mxu0 0
    %599 = vmatmul.mubr.bf16.gmra.mrb[0].mxu0 %v533
    %v600 = vpop.f32.mrb[0].mxu0
    %v601 = vadd.f32 0.0, %v600
    %v602 = vpop.f32.mrb[0].mxu0
    %v603 = vpop.f32.mrb[0].mxu0
    %v604 = vadd.f32 0.0, %v603
    %v605 = vpop.f32.mrb[0].mxu0
    %606 = vmatprep.mubr.bf16.mxu0 0
    %607 = vmatmul.mubr.bf16.gmra.mrb[0].mxu0 %v536
    %v608 = vpop.f32.mrb[0].mxu0
    %v609 = vadd.f32 0.0, %v608
    %v610 = vpop.f32.mrb[0].mxu0
    %v611 = vpop.f32.mrb[0].mxu0
    %v612 = vadd.f32 0.0, %v611
    %v613 = vpop.f32.mrb[0].mxu0
    %614 = vmatprep.mubr.bf16.mxu0 0
    %615 = vmatmul.mubr.bf16.gmra.mrb[0].mxu0 %v539
    %v616 = vpop.f32.mrb[0].mxu0
    %v617 = vadd.f32 0.0, %v616
    %v618 = vpop.f32.mrb[0].mxu0
    %v619 = vpop.f32.mrb[0].mxu0
    %v620 = vadd.f32 0.0, %v619
    %v621 = vpop.f32.mrb[0].mxu0
    %622 = vmatprep.mubr.bf16.mxu0 0
    %623 = vmatmul.mubr.bf16.gmra.mrb[0].mxu0 %v542
    %v624 = vpop.f32.mrb[0].mxu0
    %v625 = vadd.f32 0.0, %v624
    %v626 = vpop.f32.mrb[0].mxu0
    %v627 = vpop.f32.mrb[0].mxu0
    %v628 = vadd.f32 0.0, %v627
    %v629 = vpop.f32.mrb[0].mxu0
    %630 = vmatprep.mubr.bf16.mxu0 0
    %631 = vmatmul.mubr.bf16.gmra.mrb[0].mxu0 %v545
    %v632 = vpop.f32.mrb[0].mxu0
    %v633 = vadd.f32 0.0, %v632
    %v634 = vpop.f32.mrb[0].mxu0
    %v635 = vpop.f32.mrb[0].mxu0
    %v636 = vadd.f32 0.0, %v635
    %v637 = vpop.f32.mrb[0].mxu0
    %638 = vmatprep.mubr.bf16.mxu0 0
    %639 = vmatmul.mubr.bf16.gmra.mrb[0].mxu0 %v548
    %v640 = vpop.f32.mrb[0].mxu0
    %v641 = vadd.f32 0.0, %v640
    %v642 = vpop.f32.mrb[0].mxu0
    %v643 = vpop.f32.mrb[0].mxu0
    %v644 = vadd.f32 0.0, %v643
    %v645 = vpop.f32.mrb[0].mxu0
    %646 = vdwg.mxu0
    %v647 = vsel %vm217, %v585, 0.0
    %v648 = vsel %vm217, %v588, 0.0
    %v649 = vadd.f32 %v647, %v648
    %v650 = vsel %vm217, %v593, 0.0
    %v651 = vadd.f32 %v649, %v650
    %v652 = vsel %vm217, %v596, 0.0
    %v653 = vadd.f32 %v651, %v652
    %v654 = vsel %vm217, %v601, 0.0
    %v655 = vadd.f32 %v653, %v654
    %v656 = vsel %vm217, %v604, 0.0
    %v657 = vadd.f32 %v655, %v656
    %v658 = vsel %vm217, %v609, 0.0
    %v659 = vadd.f32 %v657, %v658
    %v660 = vsel %vm217, %v612, 0.0
    %v661 = vadd.f32 %v659, %v660
    %v662 = vsel %vm217, %v617, 0.0
    %v663 = vadd.f32 %v661, %v662
    %v664 = vsel %vm217, %v620, 0.0
    %v665 = vadd.f32 %v663, %v664
    %v666 = vsel %vm217, %v625, 0.0
    %v667 = vadd.f32 %v665, %v666
    %v668 = vsel %vm217, %v628, 0.0
    %v669 = vadd.f32 %v667, %v668
    %v670 = vsel %vm217, %v633, 0.0
    %v671 = vadd.f32 %v669, %v670
    %v672 = vsel %vm217, %v636, 0.0
    %v673 = vadd.f32 %v671, %v672
    %v674 = vsel %vm217, %v641, 0.0
    %v675 = vadd.f32 %v673, %v674
    %v676 = vsel %vm217, %v644, 0.0
    %v677 = vadd.f32 %v675, %v676
    %v678 = vrot.slane %v677, 4
    %v679 = vadd.f32 %v677, %v678
    %v680 = vrot.slane %v679, 2
    %v681 = vadd.f32 %v679, %v680
    %v682 = vrot.slane %v681, 1
    %v683 = vadd.f32 %v681, %v682
    %v684 = vmul.f32 %v683, 0.0078125
    %v685 = vsub.f32 %v585, %v684
    %v686 = vsub.f32 %v588, %v684
    %v687 = vsub.f32 %v593, %v684
    %v688 = vsub.f32 %v596, %v684
    %v689 = vsub.f32 %v601, %v684
    %v690 = vsub.f32 %v604, %v684
    %v691 = vsub.f32 %v609, %v684
    %v692 = vsub.f32 %v612, %v684
    %v693 = vsub.f32 %v617, %v684
    %v694 = vsub.f32 %v620, %v684
    %v695 = vsub.f32 %v625, %v684
    %v696 = vsub.f32 %v628, %v684
    %v697 = vsub.f32 %v633, %v684
    %v698 = vsub.f32 %v636, %v684
    %v699 = vsub.f32 %v641, %v684
    %v700 = vsub.f32 %v644, %v684
    %v701 = vmul.f32 %v685, %v685
    %v702 = vmul.f32 %v686, %v686
    %v703 = vmul.f32 %v687, %v687
    %v704 = vmul.f32 %v688, %v688
    %v705 = vmul.f32 %v689, %v689
    %v706 = vmul.f32 %v690, %v690
    %v707 = vmul.f32 %v691, %v691
    %v708 = vmul.f32 %v692, %v692
    %v709 = vmul.f32 %v693, %v693
    %v710 = vmul.f32 %v694, %v694
    %v711 = vmul.f32 %v695, %v695
    %v712 = vmul.f32 %v696, %v696
    %v713 = vmul.f32 %v697, %v697
    %v714 = vmul.f32 %v698, %v698
    %v715 = vmul.f32 %v699, %v699
    %v716 = vmul.f32 %v700, %v700
    %v717 = vsel %vm217, %v701, 0.0
    %v718 = vsel %vm217, %v702, 0.0
    %v719 = vadd.f32 %v717, %v718
    %v720 = vsel %vm217, %v703, 0.0
    %v721 = vadd.f32 %v719, %v720
    %v722 = vsel %vm217, %v704, 0.0
    %v723 = vadd.f32 %v721, %v722
    %v724 = vsel %vm217, %v705, 0.0
    %v725 = vadd.f32 %v723, %v724
    %v726 = vsel %vm217, %v706, 0.0
    %v727 = vadd.f32 %v725, %v726
    %v728 = vsel %vm217, %v707, 0.0
    %v729 = vadd.f32 %v727, %v728
    %v730 = vsel %vm217, %v708, 0.0
    %v731 = vadd.f32 %v729, %v730
    %v732 = vsel %vm217, %v709, 0.0
    %v733 = vadd.f32 %v731, %v732
    %v734 = vsel %vm217, %v710, 0.0
    %v735 = vadd.f32 %v733, %v734
    %v736 = vsel %vm217, %v711, 0.0
    %v737 = vadd.f32 %v735, %v736
    %v738 = vsel %vm217, %v712, 0.0
    %v739 = vadd.f32 %v737, %v738
    %v740 = vsel %vm217, %v713, 0.0
    %v741 = vadd.f32 %v739, %v740
    %v742 = vsel %vm217, %v714, 0.0
    %v743 = vadd.f32 %v741, %v742
    %v744 = vsel %vm217, %v715, 0.0
    %v745 = vadd.f32 %v743, %v744
    %v746 = vsel %vm217, %v716, 0.0
    %v747 = vadd.f32 %v745, %v746
    %v748 = vrot.slane %v747, 4
    %v749 = vadd.f32 %v747, %v748
    %v750 = vrot.slane %v749, 2
    %v751 = vadd.f32 %v749, %v750
    %v752 = vrot.slane %v751, 1
    %v753 = vadd.f32 %v751, %v752
    %v754 = vmul.f32 %v753, 0.0078125
    %v755 = vadd.f32 %v754, 1e-05
    %v756 = vrsqrt.pop %v755
    %v757 = vmul.f32 %v756, %v525
    %v758 = vlaneseq
    %v759 = vshrl.u32 %v758, 7
    %v760 = vsub.s32 0, %v759
    %v761 = vrot.slane %v757, %v760
    %v762 = vmul.f32 %v685, %v761
    %v763 = vmul.f32 %v686, %v761
    %v764 = vmul.f32 %v687, %v761
    %v765 = vmul.f32 %v688, %v761
    %v766 = vmul.f32 %v689, %v761
    %v767 = vmul.f32 %v690, %v761
    %v768 = vmul.f32 %v691, %v761
    %v769 = vmul.f32 %v692, %v761
    %v770 = vmul.f32 %v693, %v761
    %v771 = vmul.f32 %v694, %v761
    %v772 = vmul.f32 %v695, %v761
    %v773 = vmul.f32 %v696, %v761
    %v774 = vmul.f32 %v697, %v761
    %v775 = vmul.f32 %v698, %v761
    %v776 = vmul.f32 %v699, %v761
    %v777 = vmul.f32 %v700, %v761
    %v779 = vlaneseq
    %v780 = vshrl.u32 %v779, 7
    %v781 = vsub.s32 0, %v780
    %v782 = vrot.slane %v524, %v781
    %v784 = vadd.f32 %v762, %v782
    %v785 = vadd.f32 %v763, %v782
    %v786 = vadd.f32 %v764, %v782
    %v787 = vadd.f32 %v765, %v782
    %v788 = vadd.f32 %v766, %v782
    %v789 = vadd.f32 %v767, %v782
    %v790 = vadd.f32 %v768, %v782
    %v791 = vadd.f32 %v769, %v782
    %v792 = vadd.f32 %v770, %v782
    %v793 = vadd.f32 %v771, %v782
    %v794 = vadd.f32 %v772, %v782
    %v795 = vadd.f32 %v773, %v782
    %v796 = vadd.f32 %v774, %v782
    %v797 = vadd.f32 %v775, %v782
    %v798 = vadd.f32 %v776, %v782
    %v799 = vadd.f32 %v777, %v782
    %v800 = vmax.f32 %v784, 0.0
    %v801 = vmax.f32 %v785, 0.0
    %v802 = vmax.f32 %v786, 0.0
    %v803 = vmax.f32 %v787, 0.0
    %v804 = vmax.f32 %v788, 0.0
    %v805 = vmax.f32 %v789, 0.0
    %v806 = vmax.f32 %v790, 0.0
    %v807 = vmax.f32 %v791, 0.0
    %v808 = vmax.f32 %v792, 0.0
    %v809 = vmax.f32 %v793, 0.0
    %v810 = vmax.f32 %v794, 0.0
    %v811 = vmax.f32 %v795, 0.0
    %v812 = vmax.f32 %v796, 0.0
    %v813 = vmax.f32 %v797, 0.0
    %v814 = vmax.f32 %v798, 0.0
    %v815 = vmax.f32 %v799, 0.0
    %v816 = vpack.c.bf16 %v801, %v800
    %v817 = vpack.c.bf16 %v803, %v802
    %v818 = vpack.c.bf16 %v805, %v804
    %v819 = vpack.c.bf16 %v807, %v806
    %v820 = vpack.c.bf16 %v809, %v808
    %v821 = vpack.c.bf16 %v811, %v810
    %v822 = vpack.c.bf16 %v813, %v812
    %v823 = vpack.c.bf16 %v815, %v814
    %s824 = sshll.u32 %s517, 4
    %825 = dma.done %s78, %s824
    %v826 = vld [vmem:[#allocation3] sm:$0xff]
    %v827 = vld [vmem:[#allocation3 + $0x8] sm:$0xff]
    %v828 = vld [vmem:[#allocation3 + $0x10] sm:$0xff]
    %v829 = vld [vmem:[#allocation3 + $0x18] sm:$0xff]
    %v830 = vld [vmem:[%s8] sm:$0x1]
    %v832 = vsel %vm217, %v816, 0
    %v835 = vsel %vm217, %v817, 0
    %v838 = vsel %vm217, %v818, 0
    %v841 = vsel %vm217, %v819, 0
    %v844 = vsel %vm217, %v820, 0
    %v847 = vsel %vm217, %v821, 0
    %v850 = vsel %vm217, %v822, 0
    %v853 = vsel %vm217, %v823, 0
    %855 = vmatprep.subr.bf16.mxu0 0
    %856 = vmatpush1.bf16.msra.mxu0 %v826
    %857 = vmatprep.subr.bf16.mxu0 0
    %858 = vmatpush1.bf16.msra.mxu0 %v827
    %859 = vmatprep.subr.bf16.mxu0 0
    %860 = vmatpush1.bf16.msra.mxu0 %v828
    %861 = vmatprep.subr.bf16.mxu0 0
    %862 = vmatpush1.bf16.msra.mxu0 %v829
    %863 = vmatprep.subr.bf16.mxu0 0
    %864 = vmatpush1.bf16.msra.mxu0 0
    %865 = vmatprep.subr.bf16.mxu0 0
    %866 = vmatpush1.bf16.msra.mxu0 0
    %867 = vmatprep.subr.bf16.mxu0 0
    %868 = vmatpush1.bf16.msra.mxu0 0
    %869 = vmatprep.subr.bf16.mxu0 0
    %870 = vmatpush1.bf16.msra.mxu0 0
    %871 = vmatprep.subr.bf16.mxu0 0
    %872 = vmatpush1.bf16.msra.mxu0 0
    %873 = vmatprep.subr.bf16.mxu0 0
    %874 = vmatpush1.bf16.msra.mxu0 0
    %875 = vmatprep.subr.bf16.mxu0 0
    %876 = vmatpush1.bf16.msra.mxu0 0
    %877 = vmatprep.subr.bf16.mxu0 0
    %878 = vmatpush1.bf16.msra.mxu0 0
    %879 = vmatprep.subr.bf16.mxu0 0
    %880 = vmatpush1.bf16.msra.mxu0 0
    %881 = vmatprep.subr.bf16.mxu0 0
    %882 = vmatpush1.bf16.msra.mxu0 0
    %883 = vmatprep.subr.bf16.mxu0 0
    %884 = vmatpush1.bf16.msra.mxu0 0
    %885 = vmatprep.subr.bf16.mxu0 0
    %886 = vmatpush1.bf16.msra.mxu0 0
    %887 = vmatprep.mubr.bf16.mxu0 0
    %888 = vmatmul.mubr.bf16.gmra.mrb[0].mxu0 %v832
    %v889 = vpop.f32.mrb[0].mxu0
    %v890 = vadd.f32 0.0, %v889
    %v891 = vpop.f32.mrb[0].mxu0
    %v892 = vpop.f32.mrb[0].mxu0
    %v893 = vadd.f32 0.0, %v892
    %v894 = vpop.f32.mrb[0].mxu0
    %895 = vmatprep.mubr.bf16.mxu0 0
    %896 = vmatmul.mubr.bf16.gmra.mrb[0].mxu0 %v835
    %v897 = vpop.f32.mrb[0].mxu0
    %v898 = vadd.f32 0.0, %v897
    %v899 = vpop.f32.mrb[0].mxu0
    %v900 = vpop.f32.mrb[0].mxu0
    %v901 = vadd.f32 0.0, %v900
    %v902 = vpop.f32.mrb[0].mxu0
    %903 = vmatprep.mubr.bf16.mxu0 0
    %904 = vmatmul.mubr.bf16.gmra.mrb[0].mxu0 %v838
    %v905 = vpop.f32.mrb[0].mxu0
    %v906 = vadd.f32 0.0, %v905
    %v907 = vpop.f32.mrb[0].mxu0
    %v908 = vpop.f32.mrb[0].mxu0
    %v909 = vadd.f32 0.0, %v908
    %v910 = vpop.f32.mrb[0].mxu0
    %911 = vmatprep.mubr.bf16.mxu0 0
    %912 = vmatmul.mubr.bf16.gmra.mrb[0].mxu0 %v841
    %v913 = vpop.f32.mrb[0].mxu0
    %v914 = vadd.f32 0.0, %v913
    %v915 = vpop.f32.mrb[0].mxu0
    %v916 = vpop.f32.mrb[0].mxu0
    %v917 = vadd.f32 0.0, %v916
    %v918 = vpop.f32.mrb[0].mxu0
    %919 = vmatprep.mubr.bf16.mxu0 0
    %920 = vmatmul.mubr.bf16.gmra.mrb[0].mxu0 %v844
    %v921 = vpop.f32.mrb[0].mxu0
    %v922 = vadd.f32 0.0, %v921
    %v923 = vpop.f32.mrb[0].mxu0
    %v924 = vpop.f32.mrb[0].mxu0
    %v925 = vadd.f32 0.0, %v924
    %v926 = vpop.f32.mrb[0].mxu0
    %927 = vmatprep.mubr.bf16.mxu0 0
    %928 = vmatmul.mubr.bf16.gmra.mrb[0].mxu0 %v847
    %v929 = vpop.f32.mrb[0].mxu0
    %v930 = vadd.f32 0.0, %v929
    %v931 = vpop.f32.mrb[0].mxu0
    %v932 = vpop.f32.mrb[0].mxu0
    %v933 = vadd.f32 0.0, %v932
    %v934 = vpop.f32.mrb[0].mxu0
    %935 = vmatprep.mubr.bf16.mxu0 0
    %936 = vmatmul.mubr.bf16.gmra.mrb[0].mxu0 %v850
    %v937 = vpop.f32.mrb[0].mxu0
    %v938 = vadd.f32 0.0, %v937
    %v939 = vpop.f32.mrb[0].mxu0
    %v940 = vpop.f32.mrb[0].mxu0
    %v941 = vadd.f32 0.0, %v940
    %v942 = vpop.f32.mrb[0].mxu0
    %943 = vmatprep.mubr.bf16.mxu0 0
    %944 = vmatmul.mubr.bf16.gmra.mrb[0].mxu0 %v853
    %v945 = vpop.f32.mrb[0].mxu0
    %v946 = vadd.f32 0.0, %v945
    %v947 = vpop.f32.mrb[0].mxu0
    %v948 = vpop.f32.mrb[0].mxu0
    %v949 = vadd.f32 0.0, %v948
    %v950 = vpop.f32.mrb[0].mxu0
    %951 = vdwg.mxu0
    %v952 = vadd.f32 %v890, %v893
    %v953 = vadd.f32 %v952, %v898
    %v954 = vadd.f32 %v953, %v901
    %v955 = vadd.f32 %v954, %v906
    %v956 = vadd.f32 %v955, %v909
    %v957 = vadd.f32 %v956, %v914
    %v958 = vadd.f32 %v957, %v917
    %v959 = vadd.f32 %v958, %v922
    %v960 = vadd.f32 %v959, %v925
    %v961 = vadd.f32 %v960, %v930
    %v962 = vadd.f32 %v961, %v933
    %v963 = vadd.f32 %v962, %v938
    %v964 = vadd.f32 %v963, %v941
    %v965 = vadd.f32 %v964, %v946
    %v966 = vadd.f32 %v965, %v949
    %v967 = vrot.slane %v966, 4
    %v968 = vadd.f32 %v966, %v967
    %v969 = vrot.slane %v968, 2
    %v970 = vadd.f32 %v968, %v969
    %v971 = vrot.slane %v970, 1
    %v972 = vadd.f32 %v970, %v971
    %v973 = vmul.f32 %v972, 0.0078125
    %v974 = vsub.f32 %v890, %v973
    %v975 = vsub.f32 %v893, %v973
    %v976 = vsub.f32 %v898, %v973
    %v977 = vsub.f32 %v901, %v973
    %v978 = vsub.f32 %v906, %v973
    %v979 = vsub.f32 %v909, %v973
    %v980 = vsub.f32 %v914, %v973
    %v981 = vsub.f32 %v917, %v973
    %v982 = vsub.f32 %v922, %v973
    %v983 = vsub.f32 %v925, %v973
    %v984 = vsub.f32 %v930, %v973
    %v985 = vsub.f32 %v933, %v973
    %v986 = vsub.f32 %v938, %v973
    %v987 = vsub.f32 %v941, %v973
    %v988 = vsub.f32 %v946, %v973
    %v989 = vsub.f32 %v949, %v973
    %v990 = vmul.f32 %v974, %v974
    %v991 = vmul.f32 %v975, %v975
    %v992 = vmul.f32 %v976, %v976
    %v993 = vmul.f32 %v977, %v977
    %v994 = vmul.f32 %v978, %v978
    %v995 = vmul.f32 %v979, %v979
    %v996 = vmul.f32 %v980, %v980
    %v997 = vmul.f32 %v981, %v981
    %v998 = vmul.f32 %v982, %v982
    %v999 = vmul.f32 %v983, %v983
    %v1000 = vmul.f32 %v984, %v984
    %v1001 = vmul.f32 %v985, %v985
    %v1002 = vmul.f32 %v986, %v986
    %v1003 = vmul.f32 %v987, %v987
    %v1004 = vmul.f32 %v988, %v988
    %v1005 = vmul.f32 %v989, %v989
    %v1006 = vadd.f32 %v990, %v991
    %v1007 = vadd.f32 %v1006, %v992
    %v1008 = vadd.f32 %v1007, %v993
    %v1009 = vadd.f32 %v1008, %v994
    %v1010 = vadd.f32 %v1009, %v995
    %v1011 = vadd.f32 %v1010, %v996
    %v1012 = vadd.f32 %v1011, %v997
    %v1013 = vadd.f32 %v1012, %v998
    %v1014 = vadd.f32 %v1013, %v999
    %v1015 = vadd.f32 %v1014, %v1000
    %v1016 = vadd.f32 %v1015, %v1001
    %v1017 = vadd.f32 %v1016, %v1002
    %v1018 = vadd.f32 %v1017, %v1003
    %v1019 = vadd.f32 %v1018, %v1004
    %v1020 = vadd.f32 %v1019, %v1005
    %v1021 = vrot.slane %v1020, 4
    %v1022 = vadd.f32 %v1020, %v1021
    %v1023 = vrot.slane %v1022, 2
    %v1024 = vadd.f32 %v1022, %v1023
    %v1025 = vrot.slane %v1024, 1
    %v1026 = vadd.f32 %v1024, %v1025
    %v1027 = vmul.f32 %v1026, 0.0078125
    %v1028 = vadd.f32 %v1027, 1e-05
    %v1029 = vrsqrt.pop %v1028
    %v1030 = vmul.f32 %v1029, %v830
    %v1031 = vlaneseq
    %v1032 = vshrl.u32 %v1031, 7
    %v1033 = vsub.s32 0, %v1032
    %v1034 = vrot.slane %v1030, %v1033
    %v1035 = vmul.f32 %v974, %v1034
    %v1036 = vmul.f32 %v975, %v1034
    %v1037 = vmul.f32 %v976, %v1034
    %v1038 = vmul.f32 %v977, %v1034
    %v1039 = vmul.f32 %v978, %v1034
    %v1040 = vmul.f32 %v979, %v1034
    %v1041 = vmul.f32 %v980, %v1034
    %v1042 = vmul.f32 %v981, %v1034
    %v1043 = vmul.f32 %v982, %v1034
    %v1044 = vmul.f32 %v983, %v1034
    %v1045 = vmul.f32 %v984, %v1034
    %v1046 = vmul.f32 %v985, %v1034
    %v1047 = vmul.f32 %v986, %v1034
    %v1048 = vmul.f32 %v987, %v1034
    %v1049 = vmul.f32 %v988, %v1034
    %v1050 = vmul.f32 %v989, %v1034
    %1051 = vst [vmem:[#allocation5] sm:$0xff] %v1035
    %1052 = vst [vmem:[#allocation5 + $0x8] sm:$0xff] %v1036
    %1053 = vst [vmem:[#allocation5 + $0x10] sm:$0xff] %v1037
    %1054 = vst [vmem:[#allocation5 + $0x18] sm:$0xff] %v1038
    %1055 = vst [vmem:[#allocation5 + $0x20] sm:$0xff] %v1039
    %1056 = vst [vmem:[#allocation5 + $0x28] sm:$0xff] %v1040
    %1057 = vst [vmem:[#allocation5 + $0x30] sm:$0xff] %v1041
    %1058 = vst [vmem:[#allocation5 + $0x38] sm:$0xff] %v1042
    %1059 = vst [vmem:[#allocation5 + $0x40] sm:$0xff] %v1043
    %1060 = vst [vmem:[#allocation5 + $0x48] sm:$0xff] %v1044
    %1061 = vst [vmem:[#allocation5 + $0x50] sm:$0xff] %v1045
    %1062 = vst [vmem:[#allocation5 + $0x58] sm:$0xff] %v1046
    %1063 = vst [vmem:[#allocation5 + $0x60] sm:$0xff] %v1047
    %1064 = vst [vmem:[#allocation5 + $0x68] sm:$0xff] %v1048
    %1065 = vst [vmem:[#allocation5 + $0x70] sm:$0xff] %v1049
    %1066 = vst [vmem:[#allocation5 + $0x78] sm:$0xff] %v1050
    // Predicated region
    $region98: #{tpu_custom_call.1} parent=1 // pred_check
      _
    $region99: #{tpu_custom_call.1} parent=1 // pred_check_branch
      %1068 = sbr.rel (0) target = $region101
    $region100: #{tpu_custom_call.1} parent=1 // pred_region
      %s1070 = ssub.s32 2048, 2048
      %1071 = vsyncadd [#allocation6], %s1070
      %s1072 = sshll.u32 [#allocation5], 4
      %s1073 = int_to_ptr.vmem [resolvable:$true] %s1072
      %1078 = dma.vmem_to_hbm [thread:$0]  %s1073, 2048, %s9, [#allocation6], 128, 128, 8
    $region101: #{tpu_custom_call.1} parent=1 // pred_fallthru
      _
    // Predicated region
    $region102: #{tpu_custom_call.1} parent=1 // pred_check
      _
    $region103: #{tpu_custom_call.1} parent=1 // pred_check_branch
      %1080 = sbr.rel (0) target = $region105
    $region104: #{tpu_custom_call.1} parent=1 // pred_region
      %1081 = dma.done [#allocation6], 2048
    $region105: #{tpu_custom_call.1} parent=1 // pred_fallthru
      _
    %1082 = vsyncpa [#allocation6], 1
  %1083 = vsyncmov [#allocation4]
  %s1084 = vpop.sfrf %1083
  %p1085 = scmp.eq.s32.totalorder %s1084, 0
  %p1086 = pneg %p1085
  %1088 = shalt.err (%p1086)
  %s1089 = scalar_lea.sflag [#allocation4], 1
  %1090 = vsyncmov %s1089
  %s1091 = vpop.sfrf %1090
  %p1092 = scmp.eq.s32.totalorder %s1091, 0
  %p1093 = pneg %p1092
  %1095 = shalt.err (%p1093)

</llo_original>
